<compile_context>
chip_gen: v7x
topology: tpu7x:2x2x1
jax: 0.10.0
libtpu: 0.0.40
codegen_flags: <defaults>
</compile_context>

<pallas_src>
import functools
import math

import jax
import jax.numpy as jnp
from jax.experimental import pallas as pl
from jax.experimental.pallas import tpu as pltpu


def _round_up(n, m):
    return ((n + m - 1) // m) * m


# ------------------------------ kernel body ----------------------------------
def _mlp_kernel(relu_flags, use_softmax, x_ref, *rest):
    """Fused Linear(+ReLU) chain [+ softmax] on one (TB, in_dim) batch tile.

    Operands after x_ref: alternating (w bf16, b f32) per layer -- all
    VMEM-resident (constant index_map) -- then the lane-dense output ref.
    """
    out_ref = rest[-1]
    wb = rest[:-1]
    n_layers = len(relu_flags)

    h = x_ref[...]                                      # already bf16, no cast
    for i, do_relu in enumerate(relu_flags):
        w_ref, b_ref = wb[2 * i], wb[2 * i + 1]
        # bf16 x bf16 into the MXU, f32 accumulation; bias/ReLU stay f32.
        y = jnp.dot(h, w_ref[...], preferred_element_type=jnp.float32) + b_ref[...]
        if do_relu:
            y = jnp.maximum(y, 0.0)
        # Re-feed the MXU in bf16; keep the last layer's result in f32 for
        # softmax / the output store.
        h = y.astype(jnp.bfloat16) if i + 1 < n_layers else y

    if use_softmax:
        # Padded logit columns carry a -1e30 bias (see prepare_params), so a
        # plain, unmasked softmax is exact: they exp to 0 and drop out of the
        # sum. No iota / compare / select needed.
        m = jnp.max(h, axis=1, keepdims=True)
        e = jnp.exp(h - m)
        s = jnp.sum(e, axis=1, keepdims=True)
        h = e * pl.reciprocal(s, approx=True)           # EUP slot, ~free

    out_ref[...] = h.astype(out_ref.dtype)              # lane-dense (TB, 128k) store


# --------------------------- one-time param prep ------------------------------
def prepare_params(params, *, use_softmax, only_lv=False):
    """Pre-cast weights to bf16 (biases stay f32) and pad the final layer to a
    128-lane multiple ONCE, outside the hot path.  When softmax is enabled the
    padded bias columns are -1e30 so the in-kernel softmax needs no mask."""
    if only_lv:
        n_layers = 4
        relu_flags = (True,) * 4          # encoder (3 Linear+ReLU) + latent_vector
        kernel_softmax = False
    else:
        n_layers = 7
        relu_flags = (True,) * 6 + (False,)
        kernel_softmax = bool(use_softmax)

    out_dim = params[f"w{n_layers - 1}"].shape[1]
    out_pad = _round_up(out_dim, 128)     # lane-dense output width

    wb = []
    for i in range(n_layers):
        w = params[f"w{i}"].astype(jnp.bfloat16)
        b = params[f"b{i}"].astype(jnp.float32)
        if i == n_layers - 1 and out_pad != out_dim:
            w = jnp.pad(w, ((0, 0), (0, out_pad - out_dim)))
            bias_fill = -1e30 if kernel_softmax else 0.0
            b = jnp.pad(b, ((0, 0), (0, out_pad - out_dim)),
                        constant_values=bias_fill)
        wb += [w, b]

    return dict(wb=tuple(wb), relu_flags=relu_flags, use_softmax=kernel_softmax,
                out_dim=out_dim, out_pad=out_pad)


# -------------------- tiny-batch plain-XLA fallback ---------------------------
def _xla_forward(x, prepared):
    """Mirrors the kernel math in plain jnp for batches where the pallas_call
    fixed cost + one-shot weight DMA would dominate."""
    wb = prepared["wb"]
    relu_flags = prepared["relu_flags"]
    n_layers = len(relu_flags)
    h = x.astype(jnp.bfloat16)
    for i, do_relu in enumerate(relu_flags):
        y = jnp.dot(h, wb[2 * i], preferred_element_type=jnp.float32) + wb[2 * i + 1]
        if do_relu:
            y = jnp.maximum(y, 0.0)
        h = y.astype(jnp.bfloat16) if i + 1 < n_layers else y
    h = h[:, :prepared["out_dim"]]
    if prepared["use_softmax"]:
        h = jax.nn.softmax(h, axis=1)
    return h


# --------------------------------- wrapper ------------------------------------
def classifier_forward(x, prepared, *, block_batch=4096, out_dtype=jnp.float32,
                       small_batch_fallback=False, small_batch_threshold=64):
    """prepared: output of prepare_params().  block_batch=4096 keeps the
    per-tile VMEM footprint ~25 MiB (safe on v7x's 64 MiB); v5e/v6e users may
    pass 8192 -- the 64 MiB vmem_limit below already covers it."""
    batch, in_dim = x.shape

    if small_batch_fallback and batch <= small_batch_threshold:
        return _xla_forward(x, prepared).astype(out_dtype)

    wb = list(prepared["wb"])
    relu_flags = prepared["relu_flags"]
    use_softmax = prepared["use_softmax"]
    out_dim = prepared["out_dim"]
    out_pad = prepared["out_pad"]
    n_layers = len(relu_flags)

    x = x.astype(jnp.bfloat16)            # halve input DMA / VMEM double-buffer

    # Batch tile size: amortize the per-grid-step overhead with big tiles, but
    # for large batches keep >=4 grid steps so the ("parallel",) axis feeds
    # both v7x TensorCores and the I/O pipeline has depth.
    MIN_TB = 256
    if batch <= 4 * MIN_TB:
        tb = _round_up(batch, 8)          # single tile; small batch
    else:
        n_tiles = max(4, pl.cdiv(batch, block_batch))
        tb = min(block_batch, _round_up(pl.cdiv(batch, n_tiles), 8))
    padded_batch = _round_up(batch, tb)
    if padded_batch != batch:
        x = jnp.pad(x, ((0, padded_batch - batch), (0, 0)))
    grid = (padded_batch // tb,)

    x_spec = pl.BlockSpec((tb, in_dim), lambda i: (i, 0))
    # Weights/biases: constant index_map -> fetched once, VMEM-resident across
    # the whole grid.  (Single-buffering them would only save ~250 KB.)
    wb_specs = [pl.BlockSpec(a.shape, lambda i: (0, 0)) for a in wb]
    out_spec = pl.BlockSpec((tb, out_pad), lambda i: (i, 0))

    flops = 2 * padded_batch * sum(
        wb[2 * i].shape[0] * wb[2 * i].shape[1] for i in range(n_layers))
    transcendentals = padded_batch * out_pad if use_softmax else 0
    bytes_accessed = (padded_batch * in_dim * 2
                      + padded_batch * out_pad * jnp.dtype(out_dtype).itemsize
                      + sum(int(a.size) * a.dtype.itemsize for a in wb))

    out = pl.pallas_call(
        functools.partial(_mlp_kernel, relu_flags, use_softmax),
        out_shape=jax.ShapeDtypeStruct((padded_batch, out_pad), out_dtype),
        grid=grid,
        in_specs=[x_spec] + wb_specs,
        out_specs=out_spec,
        compiler_params=pltpu.CompilerParams(
            dimension_semantics=("parallel",),       # megacore on v7x
            vmem_limit_bytes=64 * 1024 * 1024),      # room for big batch tiles
        cost_estimate=pl.CostEstimate(flops=flops,
                                      transcendentals=transcendentals,
                                      bytes_accessed=bytes_accessed),
    )(x, *wb)

    return out[:batch, :out_dim]


# ------------------------- deterministic parameters ---------------------------
def init_params(key, input_dim, latent_vector_size, classifier_output):
    sizes = [
        (input_dim, 400),               # encoder.0
        (400, 100),                     # encoder.2
        (100, 20),                      # encoder.4
        (20, latent_vector_size),       # latent_vector.0
        (latent_vector_size, 20),       # classifier.0
        (20, 50),                       # classifier.2
        (50, classifier_output),        # classifier.4
    ]
    params = {}
    for i, (fan_in, fan_out) in enumerate(sizes):
        key, kw, kb = jax.random.split(key, 3)
        bound = 1.0 / math.sqrt(fan_in)   # PyTorch nn.Linear default init bound
        params[f"w{i}"] = jax.random.uniform(
            kw, (fan_in, fan_out), jnp.float32, minval=-bound, maxval=bound)
        params[f"b{i}"] = jax.random.uniform(
            kb, (1, fan_out), jnp.float32, minval=-bound, maxval=bound)
    return params


# ---------------------------- pure-JAX reference ------------------------------
def reference_forward(x, params, *, use_softmax, only_lv=False):
    h = x.astype(jnp.float32)
    for i in range(4):  # encoder (0,1,2) + latent_vector (3): Linear+ReLU
        h = jnp.maximum(h @ params[f"w{i}"] + params[f"b{i}"], 0.0)
    if only_lv:
        return h
    for i in (4, 5):
        h = jnp.maximum(h @ params[f"w{i}"] + params[f"b{i}"], 0.0)
    h = h @ params["w6"] + params["b6"]
    if use_softmax:
        h = jax.nn.softmax(h, axis=1)
    return h


if __name__ == "__main__":
    batch = 8
    input_dim = 32
    latent_vector_size = 16
    classifier_output = 10
    use_softmax = True

    key = jax.random.PRNGKey(0)
    key, kx = jax.random.split(key)
    x = jax.random.normal(kx, (batch, input_dim), jnp.float32)
    params = init_params(key, input_dim, latent_vector_size, classifier_output)

    # One-time prep (pad + bf16 cast) outside the hot path.
    prep_full = prepare_params(params, use_softmax=use_softmax)
    prep_lv = prepare_params(params, use_softmax=use_softmax, only_lv=True)

    # Full forward (encoder -> latent -> classifier -> softmax)
    out = jax.block_until_ready(classifier_forward(x, prep_full))
    ref = reference_forward(x, params, use_softmax=use_softmax)
    assert out.shape == (batch, classifier_output)
    # bf16 MXU operands + approx reciprocal vs f32 reference -> relaxed tol.
    assert jnp.allclose(out, ref, atol=5e-2, rtol=5e-2), "mismatch vs reference"

    # only_lv path (encoder -> latent vector)
    lv = jax.block_until_ready(classifier_forward(x, prep_lv))
    lv_ref = reference_forward(x, params, use_softmax=use_softmax, only_lv=True)
    assert lv.shape == (batch, latent_vector_size)
    assert jnp.allclose(lv, lv_ref, atol=5e-2, rtol=5e-2), "mismatch (only_lv)"

    print("KERNEL_OK")
</pallas_src>

<mosaic_0001>
module attributes {stable_mosaic.version = 11 : i64} {
  func.func @_mlp_kernel(%arg0: i32, %arg1: memref<8x32xbf16, #tpu.memory_space<vmem>>, %arg2: memref<32x400xbf16, #tpu.memory_space<vmem>>, %arg3: memref<1x400xf32, #tpu.memory_space<vmem>>, %arg4: memref<400x100xbf16, #tpu.memory_space<vmem>>, %arg5: memref<1x100xf32, #tpu.memory_space<vmem>>, %arg6: memref<100x20xbf16, #tpu.memory_space<vmem>>, %arg7: memref<1x20xf32, #tpu.memory_space<vmem>>, %arg8: memref<20x16xbf16, #tpu.memory_space<vmem>>, %arg9: memref<1x16xf32, #tpu.memory_space<vmem>>, %arg10: memref<16x20xbf16, #tpu.memory_space<vmem>>, %arg11: memref<1x20xf32, #tpu.memory_space<vmem>>, %arg12: memref<20x50xbf16, #tpu.memory_space<vmem>>, %arg13: memref<1x50xf32, #tpu.memory_space<vmem>>, %arg14: memref<50x128xbf16, #tpu.memory_space<vmem>>, %arg15: memref<1x128xf32, #tpu.memory_space<vmem>>, %arg16: memref<8x128xf32, #tpu.memory_space<vmem>>) attributes {dimension_semantics = [#tpu.dimension_semantics<parallel>], iteration_bounds = array<i64: 1>, scalar_prefetch = 0 : i64, scratch_operands = 0 : i64, tpu.core_type = #tpu.core_type<tc>, window_params = [{transform_indices = @transform_0, window_bounds = array<i64: 8, 32>}, {pipeline_mode = #tpu.pipeline_mode<synchronous>, transform_indices = @transform_1, window_bounds = array<i64: 32, 400>}, {pipeline_mode = #tpu.pipeline_mode<synchronous>, transform_indices = @transform_2, window_bounds = array<i64: 1, 400>}, {pipeline_mode = #tpu.pipeline_mode<synchronous>, transform_indices = @transform_3, window_bounds = array<i64: 400, 100>}, {pipeline_mode = #tpu.pipeline_mode<synchronous>, transform_indices = @transform_4, window_bounds = array<i64: 1, 100>}, {pipeline_mode = #tpu.pipeline_mode<synchronous>, transform_indices = @transform_5, window_bounds = array<i64: 100, 20>}, {pipeline_mode = #tpu.pipeline_mode<synchronous>, transform_indices = @transform_6, window_bounds = array<i64: 1, 20>}, {pipeline_mode = #tpu.pipeline_mode<synchronous>, transform_indices = @transform_7, window_bounds = array<i64: 20, 16>}, {pipeline_mode = #tpu.pipeline_mode<synchronous>, transform_indices = @transform_8, window_bounds = array<i64: 1, 16>}, {pipeline_mode = #tpu.pipeline_mode<synchronous>, transform_indices = @transform_9, window_bounds = array<i64: 16, 20>}, {pipeline_mode = #tpu.pipeline_mode<synchronous>, transform_indices = @transform_10, window_bounds = array<i64: 1, 20>}, {pipeline_mode = #tpu.pipeline_mode<synchronous>, transform_indices = @transform_11, window_bounds = array<i64: 20, 50>}, {pipeline_mode = #tpu.pipeline_mode<synchronous>, transform_indices = @transform_12, window_bounds = array<i64: 1, 50>}, {pipeline_mode = #tpu.pipeline_mode<synchronous>, transform_indices = @transform_13, window_bounds = array<i64: 50, 128>}, {pipeline_mode = #tpu.pipeline_mode<synchronous>, transform_indices = @transform_14, window_bounds = array<i64: 1, 128>}, {transform_indices = @transform_15, window_bounds = array<i64: 8, 128>}]} {
    %c0 = arith.constant 0 : index
    %c0_0 = arith.constant 0 : index
    %0 = vector.load %arg1[%c0, %c0_0] : memref<8x32xbf16, #tpu.memory_space<vmem>>, vector<8x32xbf16>
    %c0_1 = arith.constant 0 : index
    %c0_2 = arith.constant 0 : index
    %1 = vector.load %arg2[%c0_1, %c0_2] : memref<32x400xbf16, #tpu.memory_space<vmem>>, vector<32x400xbf16>
    %cst = arith.constant dense<0.000000e+00> : vector<8x400xf32>
    %2 = tpu.matmul %0, %1, %cst {dimension_numbers = #tpu.dot_dimension_numbers<[1], [0], [0], [1], [0, 0, 1, 1], [], []>} : vector<8x32xbf16>, vector<32x400xbf16>, vector<8x400xf32> -> vector<8x400xf32>
    %c0_3 = arith.constant 0 : index
    %c0_4 = arith.constant 0 : index
    %3 = vector.load %arg3[%c0_3, %c0_4] : memref<1x400xf32, #tpu.memory_space<vmem>>, vector<1x400xf32>
    %4 = vector.broadcast %3 : vector<1x400xf32> to vector<8x400xf32>
    %5 = arith.addf %2, %4 : vector<8x400xf32>
    %cst_5 = arith.constant 0.000000e+00 : f32
    %6 = vector.broadcast %cst_5 : f32 to vector<8x400xf32>
    %7 = arith.maximumf %5, %6 : vector<8x400xf32>
    %8 = arith.truncf %7 : vector<8x400xf32> to vector<8x400xbf16>
    %c0_6 = arith.constant 0 : index
    %c0_7 = arith.constant 0 : index
    %9 = vector.load %arg4[%c0_6, %c0_7] : memref<400x100xbf16, #tpu.memory_space<vmem>>, vector<400x100xbf16>
    %cst_8 = arith.constant dense<0.000000e+00> : vector<8x100xf32>
    %10 = tpu.matmul %8, %9, %cst_8 {dimension_numbers = #tpu.dot_dimension_numbers<[1], [0], [0], [1], [0, 0, 1, 1], [], []>} : vector<8x400xbf16>, vector<400x100xbf16>, vector<8x100xf32> -> vector<8x100xf32>
    %c0_9 = arith.constant 0 : index
    %c0_10 = arith.constant 0 : index
    %11 = vector.load %arg5[%c0_9, %c0_10] : memref<1x100xf32, #tpu.memory_space<vmem>>, vector<1x100xf32>
    %12 = vector.broadcast %11 : vector<1x100xf32> to vector<8x100xf32>
    %13 = arith.addf %10, %12 : vector<8x100xf32>
    %cst_11 = arith.constant 0.000000e+00 : f32
    %14 = vector.broadcast %cst_11 : f32 to vector<8x100xf32>
    %15 = arith.maximumf %13, %14 : vector<8x100xf32>
    %16 = arith.truncf %15 : vector<8x100xf32> to vector<8x100xbf16>
    %c0_12 = arith.constant 0 : index
    %c0_13 = arith.constant 0 : index
    %17 = vector.load %arg6[%c0_12, %c0_13] : memref<100x20xbf16, #tpu.memory_space<vmem>>, vector<100x20xbf16>
    %cst_14 = arith.constant dense<0.000000e+00> : vector<8x20xf32>
    %18 = tpu.matmul %16, %17, %cst_14 {dimension_numbers = #tpu.dot_dimension_numbers<[1], [0], [0], [1], [0, 0, 1, 1], [], []>} : vector<8x100xbf16>, vector<100x20xbf16>, vector<8x20xf32> -> vector<8x20xf32>
    %c0_15 = arith.constant 0 : index
    %c0_16 = arith.constant 0 : index
    %19 = vector.load %arg7[%c0_15, %c0_16] : memref<1x20xf32, #tpu.memory_space<vmem>>, vector<1x20xf32>
    %20 = vector.broadcast %19 : vector<1x20xf32> to vector<8x20xf32>
    %21 = arith.addf %18, %20 : vector<8x20xf32>
    %cst_17 = arith.constant 0.000000e+00 : f32
    %22 = vector.broadcast %cst_17 : f32 to vector<8x20xf32>
    %23 = arith.maximumf %21, %22 : vector<8x20xf32>
    %24 = arith.truncf %23 : vector<8x20xf32> to vector<8x20xbf16>
    %c0_18 = arith.constant 0 : index
    %c0_19 = arith.constant 0 : index
    %25 = vector.load %arg8[%c0_18, %c0_19] : memref<20x16xbf16, #tpu.memory_space<vmem>>, vector<20x16xbf16>
    %cst_20 = arith.constant dense<0.000000e+00> : vector<8x16xf32>
    %26 = tpu.matmul %24, %25, %cst_20 {dimension_numbers = #tpu.dot_dimension_numbers<[1], [0], [0], [1], [0, 0, 1, 1], [], []>} : vector<8x20xbf16>, vector<20x16xbf16>, vector<8x16xf32> -> vector<8x16xf32>
    %c0_21 = arith.constant 0 : index
    %c0_22 = arith.constant 0 : index
    %27 = vector.load %arg9[%c0_21, %c0_22] : memref<1x16xf32, #tpu.memory_space<vmem>>, vector<1x16xf32>
    %28 = vector.broadcast %27 : vector<1x16xf32> to vector<8x16xf32>
    %29 = arith.addf %26, %28 : vector<8x16xf32>
    %cst_23 = arith.constant 0.000000e+00 : f32
    %30 = vector.broadcast %cst_23 : f32 to vector<8x16xf32>
    %31 = arith.maximumf %29, %30 : vector<8x16xf32>
    %32 = arith.truncf %31 : vector<8x16xf32> to vector<8x16xbf16>
    %c0_24 = arith.constant 0 : index
    %c0_25 = arith.constant 0 : index
    %33 = vector.load %arg10[%c0_24, %c0_25] : memref<16x20xbf16, #tpu.memory_space<vmem>>, vector<16x20xbf16>
    %cst_26 = arith.constant dense<0.000000e+00> : vector<8x20xf32>
    %34 = tpu.matmul %32, %33, %cst_26 {dimension_numbers = #tpu.dot_dimension_numbers<[1], [0], [0], [1], [0, 0, 1, 1], [], []>} : vector<8x16xbf16>, vector<16x20xbf16>, vector<8x20xf32> -> vector<8x20xf32>
    %c0_27 = arith.constant 0 : index
    %c0_28 = arith.constant 0 : index
    %35 = vector.load %arg11[%c0_27, %c0_28] : memref<1x20xf32, #tpu.memory_space<vmem>>, vector<1x20xf32>
    %36 = vector.broadcast %35 : vector<1x20xf32> to vector<8x20xf32>
    %37 = arith.addf %34, %36 : vector<8x20xf32>
    %cst_29 = arith.constant 0.000000e+00 : f32
    %38 = vector.broadcast %cst_29 : f32 to vector<8x20xf32>
    %39 = arith.maximumf %37, %38 : vector<8x20xf32>
    %40 = arith.truncf %39 : vector<8x20xf32> to vector<8x20xbf16>
    %c0_30 = arith.constant 0 : index
    %c0_31 = arith.constant 0 : index
    %41 = vector.load %arg12[%c0_30, %c0_31] : memref<20x50xbf16, #tpu.memory_space<vmem>>, vector<20x50xbf16>
    %cst_32 = arith.constant dense<0.000000e+00> : vector<8x50xf32>
    %42 = tpu.matmul %40, %41, %cst_32 {dimension_numbers = #tpu.dot_dimension_numbers<[1], [0], [0], [1], [0, 0, 1, 1], [], []>} : vector<8x20xbf16>, vector<20x50xbf16>, vector<8x50xf32> -> vector<8x50xf32>
    %c0_33 = arith.constant 0 : index
    %c0_34 = arith.constant 0 : index
    %43 = vector.load %arg13[%c0_33, %c0_34] : memref<1x50xf32, #tpu.memory_space<vmem>>, vector<1x50xf32>
    %44 = vector.broadcast %43 : vector<1x50xf32> to vector<8x50xf32>
    %45 = arith.addf %42, %44 : vector<8x50xf32>
    %cst_35 = arith.constant 0.000000e+00 : f32
    %46 = vector.broadcast %cst_35 : f32 to vector<8x50xf32>
    %47 = arith.maximumf %45, %46 : vector<8x50xf32>
    %48 = arith.truncf %47 : vector<8x50xf32> to vector<8x50xbf16>
    %c0_36 = arith.constant 0 : index
    %c0_37 = arith.constant 0 : index
    %49 = vector.load %arg14[%c0_36, %c0_37] : memref<50x128xbf16, #tpu.memory_space<vmem>>, vector<50x128xbf16>
    %cst_38 = arith.constant dense<0.000000e+00> : vector<8x128xf32>
    %50 = tpu.matmul %48, %49, %cst_38 {dimension_numbers = #tpu.dot_dimension_numbers<[1], [0], [0], [1], [0, 0, 1, 1], [], []>} : vector<8x50xbf16>, vector<50x128xbf16>, vector<8x128xf32> -> vector<8x128xf32>
    %c0_39 = arith.constant 0 : index
    %c0_40 = arith.constant 0 : index
    %51 = vector.load %arg15[%c0_39, %c0_40] : memref<1x128xf32, #tpu.memory_space<vmem>>, vector<1x128xf32>
    %52 = vector.broadcast %51 : vector<1x128xf32> to vector<8x128xf32>
    %53 = arith.addf %50, %52 : vector<8x128xf32>
    %cst_41 = arith.constant dense<0xFF800000> : vector<8xf32>
    %54 = vector.multi_reduction <maximumf>, %53, %cst_41 [1] : vector<8x128xf32> to vector<8xf32>
    %55 = vector.shape_cast %54 : vector<8xf32> to vector<8x1xf32>
    %56 = vector.broadcast %55 : vector<8x1xf32> to vector<8x128xf32>
    %57 = arith.subf %53, %56 : vector<8x128xf32>
    %58 = math.exp %57 : vector<8x128xf32>
    %cst_42 = arith.constant dense<0.000000e+00> : vector<8xf32>
    %59 = vector.multi_reduction <add>, %58, %cst_42 [1] : vector<8x128xf32> to vector<8xf32>
    %60 = vector.shape_cast %59 : vector<8xf32> to vector<8x1xf32>
    %61 = tpu.reciprocal %60 {approx = true} : vector<8x1xf32> -> vector<8x1xf32>
    %62 = vector.broadcast %61 : vector<8x1xf32> to vector<8x128xf32>
    %63 = arith.mulf %58, %62 : vector<8x128xf32>
    %c0_43 = arith.constant 0 : index
    %c0_44 = arith.constant 0 : index
    %64 = vector.load %arg16[%c0_43, %c0_44] : memref<8x128xf32, #tpu.memory_space<vmem>>, vector<8x128xf32>
    tpu.vector_store %arg16[%c0_43, %c0_44], %63 {strides = array<i32>} : memref<8x128xf32, #tpu.memory_space<vmem>>, vector<8x128xf32>,
    return
  }
  func.func @transform_0(%arg0: i32) -> (i32, i32) {
    %c0_i32 = arith.constant 0 : i32
    %c0_i32_0 = arith.constant 0 : i32
    return %arg0, %c0_i32 : i32, i32
  }
  func.func @transform_1(%arg0: i32) -> (i32, i32) {
    %c0_i32 = arith.constant 0 : i32
    %c0_i32_0 = arith.constant 0 : i32
    %c0_i32_1 = arith.constant 0 : i32
    return %c0_i32, %c0_i32_0 : i32, i32
  }
  func.func @transform_2(%arg0: i32) -> (i32, i32) {
    %c0_i32 = arith.constant 0 : i32
    %c0_i32_0 = arith.constant 0 : i32
    %c0_i32_1 = arith.constant 0 : i32
    return %c0_i32, %c0_i32_0 : i32, i32
  }
  func.func @transform_3(%arg0: i32) -> (i32, i32) {
    %c0_i32 = arith.constant 0 : i32
    %c0_i32_0 = arith.constant 0 : i32
    %c0_i32_1 = arith.constant 0 : i32
    return %c0_i32, %c0_i32_0 : i32, i32
  }
  func.func @transform_4(%arg0: i32) -> (i32, i32) {
    %c0_i32 = arith.constant 0 : i32
    %c0_i32_0 = arith.constant 0 : i32
    %c0_i32_1 = arith.constant 0 : i32
    return %c0_i32, %c0_i32_0 : i32, i32
  }
  func.func @transform_5(%arg0: i32) -> (i32, i32) {
    %c0_i32 = arith.constant 0 : i32
    %c0_i32_0 = arith.constant 0 : i32
    %c0_i32_1 = arith.constant 0 : i32
    return %c0_i32, %c0_i32_0 : i32, i32
  }
  func.func @transform_6(%arg0: i32) -> (i32, i32) {
    %c0_i32 = arith.constant 0 : i32
    %c0_i32_0 = arith.constant 0 : i32
    %c0_i32_1 = arith.constant 0 : i32
    return %c0_i32, %c0_i32_0 : i32, i32
  }
  func.func @transform_7(%arg0: i32) -> (i32, i32) {
    %c0_i32 = arith.constant 0 : i32
    %c0_i32_0 = arith.constant 0 : i32
    %c0_i32_1 = arith.constant 0 : i32
    return %c0_i32, %c0_i32_0 : i32, i32
  }
  func.func @transform_8(%arg0: i32) -> (i32, i32) {
    %c0_i32 = arith.constant 0 : i32
    %c0_i32_0 = arith.constant 0 : i32
    %c0_i32_1 = arith.constant 0 : i32
    return %c0_i32, %c0_i32_0 : i32, i32
  }
  func.func @transform_9(%arg0: i32) -> (i32, i32) {
    %c0_i32 = arith.constant 0 : i32
    %c0_i32_0 = arith.constant 0 : i32
    %c0_i32_1 = arith.constant 0 : i32
    return %c0_i32, %c0_i32_0 : i32, i32
  }
  func.func @transform_10(%arg0: i32) -> (i32, i32) {
    %c0_i32 = arith.constant 0 : i32
    %c0_i32_0 = arith.constant 0 : i32
    %c0_i32_1 = arith.constant 0 : i32
    return %c0_i32, %c0_i32_0 : i32, i32
  }
  func.func @transform_11(%arg0: i32) -> (i32, i32) {
    %c0_i32 = arith.constant 0 : i32
    %c0_i32_0 = arith.constant 0 : i32
    %c0_i32_1 = arith.constant 0 : i32
    return %c0_i32, %c0_i32_0 : i32, i32
  }
  func.func @transform_12(%arg0: i32) -> (i32, i32) {
    %c0_i32 = arith.constant 0 : i32
    %c0_i32_0 = arith.constant 0 : i32
    %c0_i32_1 = arith.constant 0 : i32
    return %c0_i32, %c0_i32_0 : i32, i32
  }
  func.func @transform_13(%arg0: i32) -> (i32, i32) {
    %c0_i32 = arith.constant 0 : i32
    %c0_i32_0 = arith.constant 0 : i32
    %c0_i32_1 = arith.constant 0 : i32
    return %c0_i32, %c0_i32_0 : i32, i32
  }
  func.func @transform_14(%arg0: i32) -> (i32, i32) {
    %c0_i32 = arith.constant 0 : i32
    %c0_i32_0 = arith.constant 0 : i32
    %c0_i32_1 = arith.constant 0 : i32
    return %c0_i32, %c0_i32_0 : i32, i32
  }
  func.func @transform_15(%arg0: i32) -> (i32, i32) {
    %c0_i32 = arith.constant 0 : i32
    %c0_i32_0 = arith.constant 0 : i32
    return %arg0, %c0_i32 : i32, i32
  }
}

</mosaic_0001>

<llo_original>
// kernel: tpu_custom_call.1
$region0: #{tpu_custom_call.1}
  #allocation0 [shape = 'u32[]', space=smem, size = 0x4, offset = 0x4, fixed_abs, tag = 'smem constant byte address 0x4 - core index']
  #allocation1 [shape = 'u32[144,128]{1,0:T(1,128)}', space=vmem, size = 0x12000, scoped, tag = 'internal scratch']
  %s0 = inlined_call_operand.hbm [shape: bf16[8,32], index: 0, kind: input, shape index: {}]
  %s1 = inlined_call_operand.hbm [shape: bf16[32,400], index: 1, kind: input, shape index: {}]
  %s2 = inlined_call_operand.hbm [shape: f32[1,400], index: 2, kind: input, shape index: {}]
  %s3 = inlined_call_operand.hbm [shape: bf16[400,100], index: 3, kind: input, shape index: {}]
  %s4 = inlined_call_operand.hbm [shape: f32[1,100], index: 4, kind: input, shape index: {}]
  %s5 = inlined_call_operand.hbm [shape: bf16[100,20], index: 5, kind: input, shape index: {}]
  %s6 = inlined_call_operand.hbm [shape: f32[1,20], index: 6, kind: input, shape index: {}]
  %s7 = inlined_call_operand.hbm [shape: bf16[20,16], index: 7, kind: input, shape index: {}]
  %s8 = inlined_call_operand.hbm [shape: f32[1,16], index: 8, kind: input, shape index: {}]
  %s9 = inlined_call_operand.hbm [shape: bf16[16,20], index: 9, kind: input, shape index: {}]
  %s10 = inlined_call_operand.hbm [shape: f32[1,20], index: 10, kind: input, shape index: {}]
  %s11 = inlined_call_operand.hbm [shape: bf16[20,50], index: 11, kind: input, shape index: {}]
  %s12 = inlined_call_operand.hbm [shape: f32[1,50], index: 12, kind: input, shape index: {}]
  %s13 = inlined_call_operand.hbm [shape: bf16[50,128], index: 13, kind: input, shape index: {}]
  %s14 = inlined_call_operand.hbm [shape: f32[1,128], index: 14, kind: input, shape index: {}]
  %s15 = inlined_call_operand.hbm [shape: f32[8,128], index: 15, kind: output, shape index: {}]
  %s16 = sld [smem:[#allocation0]]
  $region130: #{tpu_custom_call.1} parent=0
    _
  %s18 = ssub.s32 1, %s16
  %s19 = scalar_select 0, %s18, %s16
  $region1: #{tpu_custom_call.1} parent=0
    #allocation2 [shape = 'u8[2048]{0}', space=vmem, size = 0x800, scoped, tag = 'input window, operand 0, single buffered']
    #allocation3 [shape = 's32[1]{0}', space=sflag, size = 0x4, scoped, tag = 'scoped memory for tpu_custom_call.1']
    #allocation4 [shape = 's32[1]{0}', space=sflag, size = 0x4, scoped, tag = 'scoped memory for tpu_custom_call.1']
    #allocation5 [shape = 'u8[32768]{0}', space=vmem, size = 0x8000, scoped, tag = 'input window, operand 1, single buffered']
    #allocation6 [shape = 's32[1]{0}', space=sflag, size = 0x4, scoped, tag = 'scoped memory for tpu_custom_call.1']
    #allocation7 [shape = 'u8[2048]{0}', space=vmem, size = 0x800, scoped, tag = 'input window, operand 2, single buffered']
    #allocation8 [shape = 'u8[102400]{0}', space=vmem, size = 0x19000, scoped, tag = 'input window, operand 3, single buffered']
    #allocation9 [shape = 's32[1]{0}', space=sflag, size = 0x4, scoped, tag = 'scoped memory for tpu_custom_call.1']
    #allocation10 [shape = 'u8[512]{0}', space=vmem, size = 0x400, scoped, tag = 'input window, operand 4, single buffered']
    #allocation11 [shape = 'u8[26624]{0}', space=vmem, size = 0x6800, scoped, tag = 'input window, operand 5, single buffered']
    #allocation12 [shape = 's32[1]{0}', space=sflag, size = 0x4, scoped, tag = 'scoped memory for tpu_custom_call.1']
    #allocation13 [shape = 'u8[512]{0}', space=vmem, size = 0x400, scoped, tag = 'input window, operand 6, single buffered']
    #allocation14 [shape = 'u8[6144]{0}', space=vmem, size = 0x1800, scoped, tag = 'input window, operand 7, single buffered']
    #allocation15 [shape = 's32[1]{0}', space=sflag, size = 0x4, scoped, tag = 'scoped memory for tpu_custom_call.1']
    #allocation16 [shape = 'u8[512]{0}', space=vmem, size = 0x400, scoped, tag = 'input window, operand 8, single buffered']
    #allocation17 [shape = 'u8[4096]{0}', space=vmem, size = 0x1000, scoped, tag = 'input window, operand 9, single buffered']
    #allocation18 [shape = 's32[1]{0}', space=sflag, size = 0x4, scoped, tag = 'scoped memory for tpu_custom_call.1']
    #allocation19 [shape = 'u8[512]{0}', space=vmem, size = 0x400, scoped, tag = 'input window, operand 10, single buffered']
    #allocation20 [shape = 'u8[6144]{0}', space=vmem, size = 0x1800, scoped, tag = 'input window, operand 11, single buffered']
    #allocation21 [shape = 's32[1]{0}', space=sflag, size = 0x4, scoped, tag = 'scoped memory for tpu_custom_call.1']
    #allocation22 [shape = 'u8[512]{0}', space=vmem, size = 0x400, scoped, tag = 'input window, operand 12, single buffered']
    #allocation23 [shape = 'u8[14336]{0}', space=vmem, size = 0x3800, scoped, tag = 'input window, operand 13, single buffered']
    #allocation24 [shape = 's32[1]{0}', space=sflag, size = 0x4, scoped, tag = 'scoped memory for tpu_custom_call.1']
    #allocation25 [shape = 'u8[512]{0}', space=vmem, size = 0x400, scoped, tag = 'input window, operand 14, single buffered']
    #allocation26 [shape = 'u8[4096]{0}', space=vmem, size = 0x1000, scoped, tag = 'output window, operand 0, single buffered']
    %20 = vsyncpa [#allocation3], 0
    %21 = vsyncpa [#allocation6], 0
    %22 = vsyncpa [#allocation9], 0
    %23 = vsyncpa [#allocation12], 0
    %24 = vsyncpa [#allocation15], 0
    %25 = vsyncpa [#allocation18], 0
    %26 = vsyncpa [#allocation21], 0
    %27 = vsyncpa [#allocation24], 0
    %28 = vsyncpa [#allocation4], 0
    // Predicated region
    $region2: #{tpu_custom_call.1} parent=1 // pred_check
      _
    $region3: #{tpu_custom_call.1} parent=1 // pred_check_branch
      %30 = sbr.rel (0) target = $region5
    $region4: #{tpu_custom_call.1} parent=1 // pred_region
      %s32 = ssub.s32 64, 64
      %33 = vsyncadd [#allocation3], %s32
      %s35 = sshll.u32 [#allocation2], 4
      %s36 = int_to_ptr.vmem [resolvable:$true] %s35
      %38 = dma.hbm_to_vmem [thread:$0]  %s0, 64, %s36, [#allocation3]
    $region5: #{tpu_custom_call.1} parent=1 // pred_fallthru
      _
    // Predicated region
    $region6: #{tpu_custom_call.1} parent=1 // pred_check
      _
    $region7: #{tpu_custom_call.1} parent=1 // pred_check_branch
      %40 = sbr.rel (0) target = $region9
    $region8: #{tpu_custom_call.1} parent=1 // pred_region
      %s42 = ssub.s32 1024, 1024
      %43 = vsyncadd [#allocation6], %s42
      %s44 = sshll.u32 [#allocation5], 4
      %s45 = int_to_ptr.vmem [resolvable:$true] %s44
      %50 = dma.hbm_to_vmem [thread:$0]  %s1, 1024, %s45, [#allocation6], 256, 256, 16
    $region9: #{tpu_custom_call.1} parent=1 // pred_fallthru
      _
    // Predicated region
    $region10: #{tpu_custom_call.1} parent=1 // pred_check
      _
    $region11: #{tpu_custom_call.1} parent=1 // pred_check_branch
      %52 = sbr.rel (0) target = $region13
    $region12: #{tpu_custom_call.1} parent=1 // pred_region
      %s54 = ssub.s32 64, 64
      %55 = vsyncadd [#allocation6], %s54
      %s57 = sshll.u32 [#allocation7], 4
      %s58 = int_to_ptr.vmem [resolvable:$true] %s57
      %60 = dma.hbm_to_vmem [thread:$0]  %s2, 64, %s58, [#allocation6]
    $region13: #{tpu_custom_call.1} parent=1 // pred_fallthru
      _
    // Predicated region
    $region14: #{tpu_custom_call.1} parent=1 // pred_check
      _
    $region15: #{tpu_custom_call.1} parent=1 // pred_check_branch
      %62 = sbr.rel (0) target = $region17
    $region16: #{tpu_custom_call.1} parent=1 // pred_region
      %s64 = ssub.s32 3200, 3200
      %65 = vsyncadd [#allocation9], %s64
      %s66 = sshll.u32 [#allocation8], 4
      %s67 = int_to_ptr.vmem [resolvable:$true] %s66
      %72 = dma.hbm_to_vmem [thread:$0]  %s3, 3200, %s67, [#allocation9], 64, 64, 4
    $region17: #{tpu_custom_call.1} parent=1 // pred_fallthru
      _
    // Predicated region
    $region18: #{tpu_custom_call.1} parent=1 // pred_check
      _
    $region19: #{tpu_custom_call.1} parent=1 // pred_check_branch
      %74 = sbr.rel (0) target = $region21
    $region20: #{tpu_custom_call.1} parent=1 // pred_region
      %s76 = ssub.s32 16, 16
      %77 = vsyncadd [#allocation9], %s76
      %s79 = sshll.u32 [#allocation10], 4
      %s80 = int_to_ptr.vmem [resolvable:$true] %s79
      %82 = dma.hbm_to_vmem [thread:$0]  %s4, 16, %s80, [#allocation9]
    $region21: #{tpu_custom_call.1} parent=1 // pred_fallthru
      _
    // Predicated region
    $region22: #{tpu_custom_call.1} parent=1 // pred_check
      _
    $region23: #{tpu_custom_call.1} parent=1 // pred_check_branch
      %84 = sbr.rel (0) target = $region25
    $region24: #{tpu_custom_call.1} parent=1 // pred_region
      %s86 = ssub.s32 832, 832
      %87 = vsyncadd [#allocation12], %s86
      %s88 = sshll.u32 [#allocation11], 4
      %s89 = int_to_ptr.vmem [resolvable:$true] %s88
      %94 = dma.hbm_to_vmem [thread:$0]  %s5, 832, %s89, [#allocation12], 64, 64, 4
    $region25: #{tpu_custom_call.1} parent=1 // pred_fallthru
      _
    // Predicated region
    $region26: #{tpu_custom_call.1} parent=1 // pred_check
      _
    $region27: #{tpu_custom_call.1} parent=1 // pred_check_branch
      %96 = sbr.rel (0) target = $region29
    $region28: #{tpu_custom_call.1} parent=1 // pred_region
      %s98 = ssub.s32 16, 16
      %99 = vsyncadd [#allocation12], %s98
      %s101 = sshll.u32 [#allocation13], 4
      %s102 = int_to_ptr.vmem [resolvable:$true] %s101
      %104 = dma.hbm_to_vmem [thread:$0]  %s6, 16, %s102, [#allocation12]
    $region29: #{tpu_custom_call.1} parent=1 // pred_fallthru
      _
    // Predicated region
    $region30: #{tpu_custom_call.1} parent=1 // pred_check
      _
    $region31: #{tpu_custom_call.1} parent=1 // pred_check_branch
      %106 = sbr.rel (0) target = $region33
    $region32: #{tpu_custom_call.1} parent=1 // pred_region
      %s108 = ssub.s32 192, 192
      %109 = vsyncadd [#allocation15], %s108
      %s110 = sshll.u32 [#allocation14], 4
      %s111 = int_to_ptr.vmem [resolvable:$true] %s110
      %116 = dma.hbm_to_vmem [thread:$0]  %s7, 192, %s111, [#allocation15], 64, 64, 4
    $region33: #{tpu_custom_call.1} parent=1 // pred_fallthru
      _
    // Predicated region
    $region34: #{tpu_custom_call.1} parent=1 // pred_check
      _
    $region35: #{tpu_custom_call.1} parent=1 // pred_check_branch
      %118 = sbr.rel (0) target = $region37
    $region36: #{tpu_custom_call.1} parent=1 // pred_region
      %s120 = ssub.s32 16, 16
      %121 = vsyncadd [#allocation15], %s120
      %s123 = sshll.u32 [#allocation16], 4
      %s124 = int_to_ptr.vmem [resolvable:$true] %s123
      %126 = dma.hbm_to_vmem [thread:$0]  %s8, 16, %s124, [#allocation15]
    $region37: #{tpu_custom_call.1} parent=1 // pred_fallthru
      _
    // Predicated region
    $region38: #{tpu_custom_call.1} parent=1 // pred_check
      _
    $region39: #{tpu_custom_call.1} parent=1 // pred_check_branch
      %128 = sbr.rel (0) target = $region41
    $region40: #{tpu_custom_call.1} parent=1 // pred_region
      %s130 = ssub.s32 128, 128
      %131 = vsyncadd [#allocation18], %s130
      %s132 = sshll.u32 [#allocation17], 4
      %s133 = int_to_ptr.vmem [resolvable:$true] %s132
      %138 = dma.hbm_to_vmem [thread:$0]  %s9, 128, %s133, [#allocation18], 64, 64, 4
    $region41: #{tpu_custom_call.1} parent=1 // pred_fallthru
      _
    // Predicated region
    $region42: #{tpu_custom_call.1} parent=1 // pred_check
      _
    $region43: #{tpu_custom_call.1} parent=1 // pred_check_branch
      %140 = sbr.rel (0) target = $region45
    $region44: #{tpu_custom_call.1} parent=1 // pred_region
      %s142 = ssub.s32 16, 16
      %143 = vsyncadd [#allocation18], %s142
      %s145 = sshll.u32 [#allocation19], 4
      %s146 = int_to_ptr.vmem [resolvable:$true] %s145
      %148 = dma.hbm_to_vmem [thread:$0]  %s10, 16, %s146, [#allocation18]
    $region45: #{tpu_custom_call.1} parent=1 // pred_fallthru
      _
    // Predicated region
    $region46: #{tpu_custom_call.1} parent=1 // pred_check
      _
    $region47: #{tpu_custom_call.1} parent=1 // pred_check_branch
      %150 = sbr.rel (0) target = $region49
    $region48: #{tpu_custom_call.1} parent=1 // pred_region
      %s152 = ssub.s32 192, 192
      %153 = vsyncadd [#allocation21], %s152
      %s154 = sshll.u32 [#allocation20], 4
      %s155 = int_to_ptr.vmem [resolvable:$true] %s154
      %160 = dma.hbm_to_vmem [thread:$0]  %s11, 192, %s155, [#allocation21], 64, 64, 4
    $region49: #{tpu_custom_call.1} parent=1 // pred_fallthru
      _
    // Predicated region
    $region50: #{tpu_custom_call.1} parent=1 // pred_check
      _
    $region51: #{tpu_custom_call.1} parent=1 // pred_check_branch
      %162 = sbr.rel (0) target = $region53
    $region52: #{tpu_custom_call.1} parent=1 // pred_region
      %s164 = ssub.s32 16, 16
      %165 = vsyncadd [#allocation21], %s164
      %s167 = sshll.u32 [#allocation22], 4
      %s168 = int_to_ptr.vmem [resolvable:$true] %s167
      %170 = dma.hbm_to_vmem [thread:$0]  %s12, 16, %s168, [#allocation21]
    $region53: #{tpu_custom_call.1} parent=1 // pred_fallthru
      _
    // Predicated region
    $region54: #{tpu_custom_call.1} parent=1 // pred_check
      _
    $region55: #{tpu_custom_call.1} parent=1 // pred_check_branch
      %172 = sbr.rel (0) target = $region57
    $region56: #{tpu_custom_call.1} parent=1 // pred_region
      %s174 = ssub.s32 448, 448
      %175 = vsyncadd [#allocation24], %s174
      %s176 = sshll.u32 [#allocation23], 4
      %s177 = int_to_ptr.vmem [resolvable:$true] %s176
      %182 = dma.hbm_to_vmem [thread:$0]  %s13, 448, %s177, [#allocation24], 64, 64, 4
    $region57: #{tpu_custom_call.1} parent=1 // pred_fallthru
      _
    // Predicated region
    $region58: #{tpu_custom_call.1} parent=1 // pred_check
      _
    $region59: #{tpu_custom_call.1} parent=1 // pred_check_branch
      %184 = sbr.rel (0) target = $region61
    $region60: #{tpu_custom_call.1} parent=1 // pred_region
      %s186 = ssub.s32 16, 16
      %187 = vsyncadd [#allocation24], %s186
      %s189 = sshll.u32 [#allocation25], 4
      %s190 = int_to_ptr.vmem [resolvable:$true] %s189
      %192 = dma.hbm_to_vmem [thread:$0]  %s14, 16, %s190, [#allocation24]
    $region61: #{tpu_custom_call.1} parent=1 // pred_fallthru
      _
    // Predicated region
    $region62: #{tpu_custom_call.1} parent=1 // pred_check
      _
    $region63: #{tpu_custom_call.1} parent=1 // pred_check_branch
      %194 = sbr.rel (0) target = $region65
    $region64: #{tpu_custom_call.1} parent=1 // pred_region
      %195 = dma.done [#allocation3], 64
    $region65: #{tpu_custom_call.1} parent=1 // pred_fallthru
      _
    // Predicated region
    $region66: #{tpu_custom_call.1} parent=1 // pred_check
      _
    $region67: #{tpu_custom_call.1} parent=1 // pred_check_branch
      %197 = sbr.rel (0) target = $region69
    $region68: #{tpu_custom_call.1} parent=1 // pred_region
      %198 = dma.done [#allocation6], 1024
    $region69: #{tpu_custom_call.1} parent=1 // pred_fallthru
      _
    // Predicated region
    $region70: #{tpu_custom_call.1} parent=1 // pred_check
      _
    $region71: #{tpu_custom_call.1} parent=1 // pred_check_branch
      %200 = sbr.rel (0) target = $region73
    $region72: #{tpu_custom_call.1} parent=1 // pred_region
      %201 = dma.done [#allocation6], 64
    $region73: #{tpu_custom_call.1} parent=1 // pred_fallthru
      _
    // Predicated region
    $region74: #{tpu_custom_call.1} parent=1 // pred_check
      _
    $region75: #{tpu_custom_call.1} parent=1 // pred_check_branch
      %203 = sbr.rel (0) target = $region77
    $region76: #{tpu_custom_call.1} parent=1 // pred_region
      %204 = dma.done [#allocation9], 3200
    $region77: #{tpu_custom_call.1} parent=1 // pred_fallthru
      _
    // Predicated region
    $region78: #{tpu_custom_call.1} parent=1 // pred_check
      _
    $region79: #{tpu_custom_call.1} parent=1 // pred_check_branch
      %206 = sbr.rel (0) target = $region81
    $region80: #{tpu_custom_call.1} parent=1 // pred_region
      %207 = dma.done [#allocation9], 16
    $region81: #{tpu_custom_call.1} parent=1 // pred_fallthru
      _
    // Predicated region
    $region82: #{tpu_custom_call.1} parent=1 // pred_check
      _
    $region83: #{tpu_custom_call.1} parent=1 // pred_check_branch
      %209 = sbr.rel (0) target = $region85
    $region84: #{tpu_custom_call.1} parent=1 // pred_region
      %210 = dma.done [#allocation12], 832
    $region85: #{tpu_custom_call.1} parent=1 // pred_fallthru
      _
    // Predicated region
    $region86: #{tpu_custom_call.1} parent=1 // pred_check
      _
    $region87: #{tpu_custom_call.1} parent=1 // pred_check_branch
      %212 = sbr.rel (0) target = $region89
    $region88: #{tpu_custom_call.1} parent=1 // pred_region
      %213 = dma.done [#allocation12], 16
    $region89: #{tpu_custom_call.1} parent=1 // pred_fallthru
      _
    // Predicated region
    $region90: #{tpu_custom_call.1} parent=1 // pred_check
      _
    $region91: #{tpu_custom_call.1} parent=1 // pred_check_branch
      %215 = sbr.rel (0) target = $region93
    $region92: #{tpu_custom_call.1} parent=1 // pred_region
      %216 = dma.done [#allocation15], 192
    $region93: #{tpu_custom_call.1} parent=1 // pred_fallthru
      _
    // Predicated region
    $region94: #{tpu_custom_call.1} parent=1 // pred_check
      _
    $region95: #{tpu_custom_call.1} parent=1 // pred_check_branch
      %218 = sbr.rel (0) target = $region97
    $region96: #{tpu_custom_call.1} parent=1 // pred_region
      %219 = dma.done [#allocation15], 16
    $region97: #{tpu_custom_call.1} parent=1 // pred_fallthru
      _
    // Predicated region
    $region98: #{tpu_custom_call.1} parent=1 // pred_check
      _
    $region99: #{tpu_custom_call.1} parent=1 // pred_check_branch
      %221 = sbr.rel (0) target = $region101
    $region100: #{tpu_custom_call.1} parent=1 // pred_region
      %222 = dma.done [#allocation18], 128
    $region101: #{tpu_custom_call.1} parent=1 // pred_fallthru
      _
    // Predicated region
    $region102: #{tpu_custom_call.1} parent=1 // pred_check
      _
    $region103: #{tpu_custom_call.1} parent=1 // pred_check_branch
      %224 = sbr.rel (0) target = $region105
    $region104: #{tpu_custom_call.1} parent=1 // pred_region
      %225 = dma.done [#allocation18], 16
    $region105: #{tpu_custom_call.1} parent=1 // pred_fallthru
      _
    // Predicated region
    $region106: #{tpu_custom_call.1} parent=1 // pred_check
      _
    $region107: #{tpu_custom_call.1} parent=1 // pred_check_branch
      %227 = sbr.rel (0) target = $region109
    $region108: #{tpu_custom_call.1} parent=1 // pred_region
      %228 = dma.done [#allocation21], 192
    $region109: #{tpu_custom_call.1} parent=1 // pred_fallthru
      _
    // Predicated region
    $region110: #{tpu_custom_call.1} parent=1 // pred_check
      _
    $region111: #{tpu_custom_call.1} parent=1 // pred_check_branch
      %230 = sbr.rel (0) target = $region113
    $region112: #{tpu_custom_call.1} parent=1 // pred_region
      %231 = dma.done [#allocation21], 16
    $region113: #{tpu_custom_call.1} parent=1 // pred_fallthru
      _
    // Predicated region
    $region114: #{tpu_custom_call.1} parent=1 // pred_check
      _
    $region115: #{tpu_custom_call.1} parent=1 // pred_check_branch
      %233 = sbr.rel (0) target = $region117
    $region116: #{tpu_custom_call.1} parent=1 // pred_region
      %234 = dma.done [#allocation24], 448
    $region117: #{tpu_custom_call.1} parent=1 // pred_fallthru
      _
    // Predicated region
    $region118: #{tpu_custom_call.1} parent=1 // pred_check
      _
    $region119: #{tpu_custom_call.1} parent=1 // pred_check_branch
      %236 = sbr.rel (0) target = $region121
    $region120: #{tpu_custom_call.1} parent=1 // pred_region
      %237 = dma.done [#allocation24], 16
    $region121: #{tpu_custom_call.1} parent=1 // pred_fallthru
      _
    %v239 = vld [vmem:[#allocation2] sm:$0xf]
    %v240 = vld [vmem:[#allocation5] sm:$0xff]
    %v241 = vld [vmem:[#allocation5 + $0x8] sm:$0xff]
    %v242 = vld [vmem:[#allocation5 + $0x10] sm:$0xff]
    %v243 = vld [vmem:[#allocation5 + $0x18] sm:$0xff]
    %v244 = vld [vmem:[#allocation5 + $0x20] sm:$0xff]
    %v245 = vld [vmem:[#allocation5 + $0x28] sm:$0xff]
    %v246 = vld [vmem:[#allocation5 + $0x30] sm:$0xff]
    %v247 = vld [vmem:[#allocation5 + $0x38] sm:$0xff]
    %v248 = vld [vmem:[#allocation7] sm:$0xf]
    %v250 = vlaneseq
    %v251 = vshrl.u32 %v250, 7
    %v252 = vsub.s32 0, %v251
    %v253 = vrot.slane %v248, %v252
    %v254 = vlaneseq
    %v255 = vshrl.u32 %v254, 7
    %v256 = vsub.s32 1, %v255
    %v257 = vrot.slane %v248, %v256
    %v258 = vlaneseq
    %v259 = vshrl.u32 %v258, 7
    %v260 = vsub.s32 2, %v259
    %v261 = vrot.slane %v248, %v260
    %v262 = vlaneseq
    %v263 = vshrl.u32 %v262, 7
    %v264 = vsub.s32 3, %v263
    %v265 = vrot.slane %v248, %v264
    %v278 = vunpack.c.l.b16 %v240
    %v279 = vunpack.c.h.b16 %v240
    %v280 = vunpack.c.l.b16 %v241
    %v281 = vunpack.c.h.b16 %v241
    %v282 = vunpack.c.l.b16 %v242
    %v283 = vunpack.c.h.b16 %v242
    %v284 = vunpack.c.l.b16 %v243
    %v285 = vunpack.c.h.b16 %v243
    %v286 = vunpack.c.l.b16 %v244
    %v287 = vunpack.c.h.b16 %v244
    %v288 = vunpack.c.l.b16 %v245
    %v289 = vunpack.c.h.b16 %v245
    %v290 = vunpack.c.l.b16 %v246
    %v291 = vunpack.c.h.b16 %v246
    %v292 = vunpack.c.l.b16 %v247
    %v293 = vunpack.c.h.b16 %v247
    %v294 = vpack.c.b16 %v282, %v278
    %v295 = vpack.c.b16 %v283, %v279
    %v296 = vpack.c.b16 %v284, %v280
    %v297 = vpack.c.b16 %v285, %v281
    %v298 = vpack.c.b16 %v290, %v286
    %v299 = vpack.c.b16 %v291, %v287
    %v300 = vpack.c.b16 %v292, %v288
    %v301 = vpack.c.b16 %v293, %v289
    %vm310 = vcmask 261120
    %v312 = vsel %vm310, %v239, 0
    %314 = vmatprep.subr.bf16.mxu0 %v295
    %315 = vmatpush1.bf16.msra.mxu0 %v294
    %316 = vmatprep.subr.bf16.mxu0 %v299
    %317 = vmatpush1.bf16.msra.mxu0 %v298
    %318 = vmatprep.subr.bf16.mxu0 0
    %319 = vmatpush1.bf16.msra.mxu0 0
    %320 = vmatprep.subr.bf16.mxu0 0
    %321 = vmatpush1.bf16.msra.mxu0 0
    %322 = vmatprep.subr.bf16.mxu0 0
    %323 = vmatpush1.bf16.msra.mxu0 0
    %324 = vmatprep.subr.bf16.mxu0 0
    %325 = vmatpush1.bf16.msra.mxu0 0
    %326 = vmatprep.subr.bf16.mxu0 0
    %327 = vmatpush1.bf16.msra.mxu0 0
    %328 = vmatprep.subr.bf16.mxu0 0
    %329 = vmatpush1.bf16.msra.mxu0 0
    %330 = vmatprep.subr.bf16.mxu0 0
    %331 = vmatpush1.bf16.msra.mxu0 0
    %332 = vmatprep.subr.bf16.mxu0 0
    %333 = vmatpush1.bf16.msra.mxu0 0
    %334 = vmatprep.subr.bf16.mxu0 0
    %335 = vmatpush1.bf16.msra.mxu0 0
    %336 = vmatprep.subr.bf16.mxu0 0
    %337 = vmatpush1.bf16.msra.mxu0 0
    %338 = vmatprep.subr.bf16.mxu0 0
    %339 = vmatpush1.bf16.msra.mxu0 0
    %340 = vmatprep.subr.bf16.mxu0 0
    %341 = vmatpush1.bf16.msra.mxu0 0
    %342 = vmatprep.subr.bf16.mxu0 0
    %343 = vmatpush1.bf16.msra.mxu0 0
    %344 = vmatprep.subr.bf16.mxu0 0
    %345 = vmatpush1.bf16.msra.mxu0 0
    %346 = vmatprep.mubr.bf16.mxu0 0
    %347 = vmatmul.mubr.bf16.gmra.mrb[0].mxu0 %v312
    %v348 = vpop.f32.mrb[0].mxu0
    %v349 = vadd.f32 %v253, %v348
    %v350 = vpop.f32.mrb[0].mxu0
    %v351 = vadd.f32 %v257, %v350
    %v352 = vpop.f32.mrb[0].mxu0
    %v353 = vpop.f32.mrb[0].mxu0
    %354 = vdwg.mxu0
    %355 = vmatprep.subr.bf16.mxu0 %v297
    %356 = vmatpush1.bf16.msra.mxu0 %v296
    %357 = vmatprep.subr.bf16.mxu0 %v301
    %358 = vmatpush1.bf16.msra.mxu0 %v300
    %359 = vmatprep.subr.bf16.mxu0 0
    %360 = vmatpush1.bf16.msra.mxu0 0
    %361 = vmatprep.subr.bf16.mxu0 0
    %362 = vmatpush1.bf16.msra.mxu0 0
    %363 = vmatprep.subr.bf16.mxu0 0
    %364 = vmatpush1.bf16.msra.mxu0 0
    %365 = vmatprep.subr.bf16.mxu0 0
    %366 = vmatpush1.bf16.msra.mxu0 0
    %367 = vmatprep.subr.bf16.mxu0 0
    %368 = vmatpush1.bf16.msra.mxu0 0
    %369 = vmatprep.subr.bf16.mxu0 0
    %370 = vmatpush1.bf16.msra.mxu0 0
    %371 = vmatprep.subr.bf16.mxu0 0
    %372 = vmatpush1.bf16.msra.mxu0 0
    %373 = vmatprep.subr.bf16.mxu0 0
    %374 = vmatpush1.bf16.msra.mxu0 0
    %375 = vmatprep.subr.bf16.mxu0 0
    %376 = vmatpush1.bf16.msra.mxu0 0
    %377 = vmatprep.subr.bf16.mxu0 0
    %378 = vmatpush1.bf16.msra.mxu0 0
    %379 = vmatprep.subr.bf16.mxu0 0
    %380 = vmatpush1.bf16.msra.mxu0 0
    %381 = vmatprep.subr.bf16.mxu0 0
    %382 = vmatpush1.bf16.msra.mxu0 0
    %383 = vmatprep.subr.bf16.mxu0 0
    %384 = vmatpush1.bf16.msra.mxu0 0
    %385 = vmatprep.subr.bf16.mxu0 0
    %386 = vmatpush1.bf16.msra.mxu0 0
    %387 = vmatprep.mubr.bf16.mxu0 0
    %388 = vmatmul.mubr.bf16.gmra.mrb[0].mxu0 %v312
    %v389 = vpop.f32.mrb[0].mxu0
    %v390 = vadd.f32 %v261, %v389
    %v391 = vpop.f32.mrb[0].mxu0
    %v392 = vadd.f32 %v265, %v391
    %v393 = vpop.f32.mrb[0].mxu0
    %v394 = vpop.f32.mrb[0].mxu0
    %395 = vdwg.mxu0
    %v396 = vmax.f32 %v349, 0.0
    %v397 = vmax.f32 %v351, 0.0
    %v398 = vmax.f32 %v390, 0.0
    %v399 = vmax.f32 %v392, 0.0
    %v400 = vpack.c.bf16 %v396, %v396
    %v401 = vpack.c.bf16 %v397, %v397
    %v402 = vpack.c.bf16 %v398, %v398
    %v403 = vpack.c.bf16 %v399, %v399
    %v404 = vld [vmem:[#allocation8] sm:$0xf]
    %v405 = vld [vmem:[#allocation8 + $0x4] sm:$0xf]
    %v406 = vld [vmem:[#allocation8 + $0x8] sm:$0xf]
    %v407 = vld [vmem:[#allocation8 + $0xc] sm:$0xf]
    %v408 = vld [vmem:[#allocation8 + $0x10] sm:$0xf]
    %v409 = vld [vmem:[#allocation8 + $0x14] sm:$0xf]
    %v410 = vld [vmem:[#allocation8 + $0x18] sm:$0xf]
    %v411 = vld [vmem:[#allocation8 + $0x1c] sm:$0xf]
    %v412 = vld [vmem:[#allocation8 + $0x20] sm:$0xf]
    %v413 = vld [vmem:[#allocation8 + $0x24] sm:$0xf]
    %v414 = vld [vmem:[#allocation8 + $0x28] sm:$0xf]
    %v415 = vld [vmem:[#allocation8 + $0x2c] sm:$0xf]
    %v416 = vld [vmem:[#allocation8 + $0x30] sm:$0xf]
    %v417 = vld [vmem:[#allocation8 + $0x34] sm:$0xf]
    %v418 = vld [vmem:[#allocation8 + $0x38] sm:$0xf]
    %v419 = vld [vmem:[#allocation8 + $0x3c] sm:$0xf]
    %v420 = vld [vmem:[#allocation8 + $0x40] sm:$0xf]
    %v421 = vld [vmem:[#allocation8 + $0x44] sm:$0xf]
    %v422 = vld [vmem:[#allocation8 + $0x48] sm:$0xf]
    %v423 = vld [vmem:[#allocation8 + $0x4c] sm:$0xf]
    %v424 = vld [vmem:[#allocation8 + $0x50] sm:$0xf]
    %v425 = vld [vmem:[#allocation8 + $0x54] sm:$0xf]
    %v426 = vld [vmem:[#allocation8 + $0x58] sm:$0xf]
    %v427 = vld [vmem:[#allocation8 + $0x5c] sm:$0xf]
    %v428 = vld [vmem:[#allocation8 + $0x60] sm:$0xf]
    %v429 = vld [vmem:[#allocation8 + $0x64] sm:$0xf]
    %v430 = vld [vmem:[#allocation8 + $0x68] sm:$0xf]
    %v431 = vld [vmem:[#allocation8 + $0x6c] sm:$0xf]
    %v432 = vld [vmem:[#allocation8 + $0x70] sm:$0xf]
    %v433 = vld [vmem:[#allocation8 + $0x74] sm:$0xf]
    %v434 = vld [vmem:[#allocation8 + $0x78] sm:$0xf]
    %v435 = vld [vmem:[#allocation8 + $0x7c] sm:$0xf]
    %v436 = vld [vmem:[#allocation8 + $0x80] sm:$0xf]
    %v437 = vld [vmem:[#allocation8 + $0x84] sm:$0xf]
    %v438 = vld [vmem:[#allocation8 + $0x88] sm:$0xf]
    %v439 = vld [vmem:[#allocation8 + $0x8c] sm:$0xf]
    %v440 = vld [vmem:[#allocation8 + $0x90] sm:$0xf]
    %v441 = vld [vmem:[#allocation8 + $0x94] sm:$0xf]
    %v442 = vld [vmem:[#allocation8 + $0x98] sm:$0xf]
    %v443 = vld [vmem:[#allocation8 + $0x9c] sm:$0xf]
    %v444 = vld [vmem:[#allocation8 + $0xa0] sm:$0xf]
    %v445 = vld [vmem:[#allocation8 + $0xa4] sm:$0xf]
    %v446 = vld [vmem:[#allocation8 + $0xa8] sm:$0xf]
    %v447 = vld [vmem:[#allocation8 + $0xac] sm:$0xf]
    %v448 = vld [vmem:[#allocation8 + $0xb0] sm:$0xf]
    %v449 = vld [vmem:[#allocation8 + $0xb4] sm:$0xf]
    %v450 = vld [vmem:[#allocation8 + $0xb8] sm:$0xf]
    %v451 = vld [vmem:[#allocation8 + $0xbc] sm:$0xf]
    %v452 = vld [vmem:[#allocation8 + $0xc0] sm:$0xf]
    %v453 = vld [vmem:[#allocation8 + $0xc4] sm:$0xf]
    %v454 = vld [vmem:[#allocation10] sm:$0x1]
    %v456 = vlaneseq
    %v457 = vshrl.u32 %v456, 7
    %v458 = vsub.s32 0, %v457
    %v459 = vrot.slane %v454, %v458
    %v511 = vunpack.c.l.b16 %v404
    %v512 = vunpack.c.l.b16 %v405
    %v513 = vunpack.c.l.b16 %v406
    %v514 = vunpack.c.l.b16 %v407
    %v515 = vunpack.c.l.b16 %v408
    %v516 = vunpack.c.l.b16 %v409
    %v517 = vunpack.c.l.b16 %v410
    %v518 = vunpack.c.l.b16 %v411
    %v519 = vunpack.c.l.b16 %v412
    %v520 = vunpack.c.l.b16 %v413
    %v521 = vunpack.c.l.b16 %v414
    %v522 = vunpack.c.l.b16 %v415
    %v523 = vunpack.c.l.b16 %v416
    %v524 = vunpack.c.l.b16 %v417
    %v525 = vunpack.c.l.b16 %v418
    %v526 = vunpack.c.l.b16 %v419
    %v527 = vunpack.c.l.b16 %v420
    %v528 = vunpack.c.l.b16 %v421
    %v529 = vunpack.c.l.b16 %v422
    %v530 = vunpack.c.l.b16 %v423
    %v531 = vunpack.c.l.b16 %v424
    %v532 = vunpack.c.l.b16 %v425
    %v533 = vunpack.c.l.b16 %v426
    %v534 = vunpack.c.l.b16 %v427
    %v535 = vunpack.c.l.b16 %v428
    %v536 = vunpack.c.l.b16 %v429
    %v537 = vunpack.c.l.b16 %v430
    %v538 = vunpack.c.l.b16 %v431
    %v539 = vunpack.c.l.b16 %v432
    %v540 = vunpack.c.l.b16 %v433
    %v541 = vunpack.c.l.b16 %v434
    %v542 = vunpack.c.l.b16 %v435
    %v543 = vunpack.c.l.b16 %v436
    %v544 = vunpack.c.l.b16 %v437
    %v545 = vunpack.c.l.b16 %v438
    %v546 = vunpack.c.l.b16 %v439
    %v547 = vunpack.c.l.b16 %v440
    %v548 = vunpack.c.l.b16 %v441
    %v549 = vunpack.c.l.b16 %v442
    %v550 = vunpack.c.l.b16 %v443
    %v551 = vunpack.c.l.b16 %v444
    %v552 = vunpack.c.l.b16 %v445
    %v553 = vunpack.c.l.b16 %v446
    %v554 = vunpack.c.l.b16 %v447
    %v555 = vunpack.c.l.b16 %v448
    %v556 = vunpack.c.l.b16 %v449
    %v557 = vunpack.c.l.b16 %v450
    %v558 = vunpack.c.l.b16 %v451
    %v559 = vunpack.c.l.b16 %v452
    %v560 = vunpack.c.l.b16 %v453
    %v561 = vpack.c.b16 %v512, %v511
    %v562 = vpack.c.b16 %v514, %v513
    %v563 = vpack.c.b16 %v516, %v515
    %v564 = vpack.c.b16 %v518, %v517
    %v565 = vpack.c.b16 %v520, %v519
    %v566 = vpack.c.b16 %v522, %v521
    %v567 = vpack.c.b16 %v524, %v523
    %v568 = vpack.c.b16 %v526, %v525
    %v569 = vpack.c.b16 %v528, %v527
    %v570 = vpack.c.b16 %v530, %v529
    %v571 = vpack.c.b16 %v532, %v531
    %v572 = vpack.c.b16 %v534, %v533
    %v573 = vpack.c.b16 %v536, %v535
    %v574 = vpack.c.b16 %v538, %v537
    %v575 = vpack.c.b16 %v540, %v539
    %v576 = vpack.c.b16 %v542, %v541
    %v577 = vpack.c.b16 %v544, %v543
    %v578 = vpack.c.b16 %v546, %v545
    %v579 = vpack.c.b16 %v548, %v547
    %v580 = vpack.c.b16 %v550, %v549
    %v581 = vpack.c.b16 %v552, %v551
    %v582 = vpack.c.b16 %v554, %v553
    %v583 = vpack.c.b16 %v556, %v555
    %v584 = vpack.c.b16 %v558, %v557
    %v585 = vpack.c.b16 %v560, %v559
    %vm611 = vcmask 130048
    %v613 = vsel %vm611, %v403, 0
    %615 = vmatprep.subr.bf16.mxu0 0
    %616 = vmatpush1.bf16.msra.mxu0 %v561
    %617 = vmatprep.subr.bf16.mxu0 0
    %618 = vmatpush1.bf16.msra.mxu0 %v562
    %619 = vmatprep.subr.bf16.mxu0 0
    %620 = vmatpush1.bf16.msra.mxu0 %v563
    %621 = vmatprep.subr.bf16.mxu0 0
    %622 = vmatpush1.bf16.msra.mxu0 %v564
    %623 = vmatprep.subr.bf16.mxu0 0
    %624 = vmatpush1.bf16.msra.mxu0 %v565
    %625 = vmatprep.subr.bf16.mxu0 0
    %626 = vmatpush1.bf16.msra.mxu0 %v566
    %627 = vmatprep.subr.bf16.mxu0 0
    %628 = vmatpush1.bf16.msra.mxu0 %v567
    %629 = vmatprep.subr.bf16.mxu0 0
    %630 = vmatpush1.bf16.msra.mxu0 %v568
    %631 = vmatprep.subr.bf16.mxu0 0
    %632 = vmatpush1.bf16.msra.mxu0 %v569
    %633 = vmatprep.subr.bf16.mxu0 0
    %634 = vmatpush1.bf16.msra.mxu0 %v570
    %635 = vmatprep.subr.bf16.mxu0 0
    %636 = vmatpush1.bf16.msra.mxu0 %v571
    %637 = vmatprep.subr.bf16.mxu0 0
    %638 = vmatpush1.bf16.msra.mxu0 %v572
    %639 = vmatprep.subr.bf16.mxu0 0
    %640 = vmatpush1.bf16.msra.mxu0 %v573
    %641 = vmatprep.subr.bf16.mxu0 0
    %642 = vmatpush1.bf16.msra.mxu0 %v574
    %643 = vmatprep.subr.bf16.mxu0 0
    %644 = vmatpush1.bf16.msra.mxu0 %v575
    %645 = vmatprep.subr.bf16.mxu0 0
    %646 = vmatpush1.bf16.msra.mxu0 %v576
    %647 = vmatprep.mubr.bf16.mxu0 %v401
    %648 = vmatmul.mubr.bf16.gmra.mrb[0].mxu0 %v400
    %v649 = vpop.f32.mrb[0].mxu0
    %v650 = vadd.f32 %v459, %v649
    %v651 = vpop.f32.mrb[0].mxu0
    %v652 = vpop.f32.mrb[0].mxu0
    %v653 = vpop.f32.mrb[0].mxu0
    %654 = vdwg.mxu0
    %655 = vmatprep.subr.bf16.mxu0 0
    %656 = vmatpush1.bf16.msra.mxu0 %v577
    %657 = vmatprep.subr.bf16.mxu0 0
    %658 = vmatpush1.bf16.msra.mxu0 %v578
    %659 = vmatprep.subr.bf16.mxu0 0
    %660 = vmatpush1.bf16.msra.mxu0 %v579
    %661 = vmatprep.subr.bf16.mxu0 0
    %662 = vmatpush1.bf16.msra.mxu0 %v580
    %663 = vmatprep.subr.bf16.mxu0 0
    %664 = vmatpush1.bf16.msra.mxu0 %v581
    %665 = vmatprep.subr.bf16.mxu0 0
    %666 = vmatpush1.bf16.msra.mxu0 %v582
    %667 = vmatprep.subr.bf16.mxu0 0
    %668 = vmatpush1.bf16.msra.mxu0 %v583
    %669 = vmatprep.subr.bf16.mxu0 0
    %670 = vmatpush1.bf16.msra.mxu0 %v584
    %671 = vmatprep.subr.bf16.mxu0 0
    %672 = vmatpush1.bf16.msra.mxu0 %v585
    %673 = vmatprep.subr.bf16.mxu0 0
    %674 = vmatpush1.bf16.msra.mxu0 0
    %675 = vmatprep.subr.bf16.mxu0 0
    %676 = vmatpush1.bf16.msra.mxu0 0
    %677 = vmatprep.subr.bf16.mxu0 0
    %678 = vmatpush1.bf16.msra.mxu0 0
    %679 = vmatprep.subr.bf16.mxu0 0
    %680 = vmatpush1.bf16.msra.mxu0 0
    %681 = vmatprep.subr.bf16.mxu0 0
    %682 = vmatpush1.bf16.msra.mxu0 0
    %683 = vmatprep.subr.bf16.mxu0 0
    %684 = vmatpush1.bf16.msra.mxu0 0
    %685 = vmatprep.subr.bf16.mxu0 0
    %686 = vmatpush1.bf16.msra.mxu0 0
    %687 = vmatprep.mubr.bf16.mxu0 %v613
    %688 = vmatmul.mubr.bf16.gmra.mrb[0].mxu0 %v402
    %v689 = vpop.f32.mrb[0].mxu0
    %v690 = vadd.f32 %v650, %v689
    %v691 = vpop.f32.mrb[0].mxu0
    %v692 = vpop.f32.mrb[0].mxu0
    %v693 = vpop.f32.mrb[0].mxu0
    %694 = vdwg.mxu0
    %v695 = vmax.f32 %v690, 0.0
    %v696 = vpack.c.bf16 %v695, %v695
    %v697 = vld [vmem:[#allocation11] sm:$0xf]
    %v698 = vld [vmem:[#allocation11 + $0x4] sm:$0xf]
    %v699 = vld [vmem:[#allocation11 + $0x8] sm:$0xf]
    %v700 = vld [vmem:[#allocation11 + $0xc] sm:$0xf]
    %v701 = vld [vmem:[#allocation11 + $0x10] sm:$0xf]
    %v702 = vld [vmem:[#allocation11 + $0x14] sm:$0xf]
    %v703 = vld [vmem:[#allocation11 + $0x18] sm:$0xf]
    %v704 = vld [vmem:[#allocation11 + $0x1c] sm:$0xf]
    %v705 = vld [vmem:[#allocation11 + $0x20] sm:$0xf]
    %v706 = vld [vmem:[#allocation11 + $0x24] sm:$0xf]
    %v707 = vld [vmem:[#allocation11 + $0x28] sm:$0xf]
    %v708 = vld [vmem:[#allocation11 + $0x2c] sm:$0xf]
    %v709 = vld [vmem:[#allocation11 + $0x30] sm:$0x3]
    %v710 = vld [vmem:[#allocation13] sm:$0x1]
    %v712 = vlaneseq
    %v713 = vshrl.u32 %v712, 7
    %v714 = vsub.s32 0, %v713
    %v715 = vrot.slane %v710, %v714
    %v730 = vunpack.c.l.b16 %v697
    %v731 = vunpack.c.l.b16 %v698
    %v732 = vunpack.c.l.b16 %v699
    %v733 = vunpack.c.l.b16 %v700
    %v734 = vunpack.c.l.b16 %v701
    %v735 = vunpack.c.l.b16 %v702
    %v736 = vunpack.c.l.b16 %v703
    %v737 = vunpack.c.l.b16 %v704
    %v738 = vunpack.c.l.b16 %v705
    %v739 = vunpack.c.l.b16 %v706
    %v740 = vunpack.c.l.b16 %v707
    %v741 = vunpack.c.l.b16 %v708
    %v742 = vunpack.c.l.b16 %v709
    %v743 = vpack.c.b16 %v731, %v730
    %v744 = vpack.c.b16 %v733, %v732
    %v745 = vpack.c.b16 %v735, %v734
    %v746 = vpack.c.b16 %v737, %v736
    %v747 = vpack.c.b16 %v739, %v738
    %v748 = vpack.c.b16 %v741, %v740
    %v749 = vpack.c.b16 %v742, %v742
    %vm756 = vcmask 818176
    %v758 = vsel %vm756, %v696, 0
    %vm760 = vcmask 1041408
    %v762 = vsel %vm760, %v749, 0
    %764 = vmatprep.subr.bf16.mxu0 0
    %765 = vmatpush1.bf16.msra.mxu0 %v743
    %766 = vmatprep.subr.bf16.mxu0 0
    %767 = vmatpush1.bf16.msra.mxu0 %v744
    %768 = vmatprep.subr.bf16.mxu0 0
    %769 = vmatpush1.bf16.msra.mxu0 %v745
    %770 = vmatprep.subr.bf16.mxu0 0
    %771 = vmatpush1.bf16.msra.mxu0 %v746
    %772 = vmatprep.subr.bf16.mxu0 0
    %773 = vmatpush1.bf16.msra.mxu0 %v747
    %774 = vmatprep.subr.bf16.mxu0 0
    %775 = vmatpush1.bf16.msra.mxu0 %v748
    %776 = vmatprep.subr.bf16.mxu0 0
    %777 = vmatpush1.bf16.msra.mxu0 %v762
    %778 = vmatprep.subr.bf16.mxu0 0
    %779 = vmatpush1.bf16.msra.mxu0 0
    %780 = vmatprep.subr.bf16.mxu0 0
    %781 = vmatpush1.bf16.msra.mxu0 0
    %782 = vmatprep.subr.bf16.mxu0 0
    %783 = vmatpush1.bf16.msra.mxu0 0
    %784 = vmatprep.subr.bf16.mxu0 0
    %785 = vmatpush1.bf16.msra.mxu0 0
    %786 = vmatprep.subr.bf16.mxu0 0
    %787 = vmatpush1.bf16.msra.mxu0 0
    %788 = vmatprep.subr.bf16.mxu0 0
    %789 = vmatpush1.bf16.msra.mxu0 0
    %790 = vmatprep.subr.bf16.mxu0 0
    %791 = vmatpush1.bf16.msra.mxu0 0
    %792 = vmatprep.subr.bf16.mxu0 0
    %793 = vmatpush1.bf16.msra.mxu0 0
    %794 = vmatprep.subr.bf16.mxu0 0
    %795 = vmatpush1.bf16.msra.mxu0 0
    %796 = vmatprep.mubr.bf16.mxu0 0
    %797 = vmatmul.mubr.bf16.gmra.mrb[0].mxu0 %v758
    %v798 = vpop.f32.mrb[0].mxu0
    %v799 = vadd.f32 %v715, %v798
    %v800 = vpop.f32.mrb[0].mxu0
    %v801 = vpop.f32.mrb[0].mxu0
    %v802 = vpop.f32.mrb[0].mxu0
    %803 = vdwg.mxu0
    %v804 = vmax.f32 %v799, 0.0
    %v805 = vpack.c.bf16 %v804, %v804
    %v806 = vld [vmem:[#allocation14] sm:$0xf]
    %v807 = vld [vmem:[#allocation14 + $0x4] sm:$0xf]
    %v808 = vld [vmem:[#allocation14 + $0x8] sm:$0x3]
    %v809 = vld [vmem:[#allocation16] sm:$0x1]
    %v811 = vlaneseq
    %v812 = vshrl.u32 %v811, 7
    %v813 = vsub.s32 0, %v812
    %v814 = vrot.slane %v809, %v813
    %v819 = vunpack.c.l.b16 %v806
    %v820 = vunpack.c.l.b16 %v807
    %v821 = vunpack.c.l.b16 %v808
    %v822 = vpack.c.b16 %v820, %v819
    %v823 = vpack.c.b16 %v821, %v821
    %vm825 = vcmask 162816
    %v827 = vsel %vm825, %v805, 0
    %v830 = vsel %vm760, %v823, 0
    %832 = vmatprep.subr.bf16.mxu0 0
    %833 = vmatpush1.bf16.msra.mxu0 %v822
    %834 = vmatprep.subr.bf16.mxu0 0
    %835 = vmatpush1.bf16.msra.mxu0 %v830
    %836 = vmatprep.subr.bf16.mxu0 0
    %837 = vmatpush1.bf16.msra.mxu0 0
    %838 = vmatprep.subr.bf16.mxu0 0
    %839 = vmatpush1.bf16.msra.mxu0 0
    %840 = vmatprep.subr.bf16.mxu0 0
    %841 = vmatpush1.bf16.msra.mxu0 0
    %842 = vmatprep.subr.bf16.mxu0 0
    %843 = vmatpush1.bf16.msra.mxu0 0
    %844 = vmatprep.subr.bf16.mxu0 0
    %845 = vmatpush1.bf16.msra.mxu0 0
    %846 = vmatprep.subr.bf16.mxu0 0
    %847 = vmatpush1.bf16.msra.mxu0 0
    %848 = vmatprep.subr.bf16.mxu0 0
    %849 = vmatpush1.bf16.msra.mxu0 0
    %850 = vmatprep.subr.bf16.mxu0 0
    %851 = vmatpush1.bf16.msra.mxu0 0
    %852 = vmatprep.subr.bf16.mxu0 0
    %853 = vmatpush1.bf16.msra.mxu0 0
    %854 = vmatprep.subr.bf16.mxu0 0
    %855 = vmatpush1.bf16.msra.mxu0 0
    %856 = vmatprep.subr.bf16.mxu0 0
    %857 = vmatpush1.bf16.msra.mxu0 0
    %858 = vmatprep.subr.bf16.mxu0 0
    %859 = vmatpush1.bf16.msra.mxu0 0
    %860 = vmatprep.subr.bf16.mxu0 0
    %861 = vmatpush1.bf16.msra.mxu0 0
    %862 = vmatprep.subr.bf16.mxu0 0
    %863 = vmatpush1.bf16.msra.mxu0 0
    %864 = vmatprep.mubr.bf16.mxu0 0
    %865 = vmatmul.mubr.bf16.gmra.mrb[0].mxu0 %v827
    %v866 = vpop.f32.mrb[0].mxu0
    %v867 = vadd.f32 %v814, %v866
    %v868 = vpop.f32.mrb[0].mxu0
    %v869 = vpop.f32.mrb[0].mxu0
    %v870 = vpop.f32.mrb[0].mxu0
    %871 = vdwg.mxu0
    %v872 = vmax.f32 %v867, 0.0
    %v873 = vpack.c.bf16 %v872, %v872
    %v874 = vld [vmem:[#allocation17] sm:$0xf]
    %v875 = vld [vmem:[#allocation17 + $0x4] sm:$0xf]
    %v876 = vld [vmem:[#allocation19] sm:$0x1]
    %v878 = vlaneseq
    %v879 = vshrl.u32 %v878, 7
    %v880 = vsub.s32 0, %v879
    %v881 = vrot.slane %v876, %v880
    %v885 = vunpack.c.l.b16 %v874
    %v886 = vunpack.c.l.b16 %v875
    %v887 = vpack.c.b16 %v886, %v885
    %v890 = vsel %vm611, %v873, 0
    %892 = vmatprep.subr.bf16.mxu0 0
    %893 = vmatpush1.bf16.msra.mxu0 %v887
    %894 = vmatprep.subr.bf16.mxu0 0
    %895 = vmatpush1.bf16.msra.mxu0 0
    %896 = vmatprep.subr.bf16.mxu0 0
    %897 = vmatpush1.bf16.msra.mxu0 0
    %898 = vmatprep.subr.bf16.mxu0 0
    %899 = vmatpush1.bf16.msra.mxu0 0
    %900 = vmatprep.subr.bf16.mxu0 0
    %901 = vmatpush1.bf16.msra.mxu0 0
    %902 = vmatprep.subr.bf16.mxu0 0
    %903 = vmatpush1.bf16.msra.mxu0 0
    %904 = vmatprep.subr.bf16.mxu0 0
    %905 = vmatpush1.bf16.msra.mxu0 0
    %906 = vmatprep.subr.bf16.mxu0 0
    %907 = vmatpush1.bf16.msra.mxu0 0
    %908 = vmatprep.subr.bf16.mxu0 0
    %909 = vmatpush1.bf16.msra.mxu0 0
    %910 = vmatprep.subr.bf16.mxu0 0
    %911 = vmatpush1.bf16.msra.mxu0 0
    %912 = vmatprep.subr.bf16.mxu0 0
    %913 = vmatpush1.bf16.msra.mxu0 0
    %914 = vmatprep.subr.bf16.mxu0 0
    %915 = vmatpush1.bf16.msra.mxu0 0
    %916 = vmatprep.subr.bf16.mxu0 0
    %917 = vmatpush1.bf16.msra.mxu0 0
    %918 = vmatprep.subr.bf16.mxu0 0
    %919 = vmatpush1.bf16.msra.mxu0 0
    %920 = vmatprep.subr.bf16.mxu0 0
    %921 = vmatpush1.bf16.msra.mxu0 0
    %922 = vmatprep.subr.bf16.mxu0 0
    %923 = vmatpush1.bf16.msra.mxu0 0
    %924 = vmatprep.mubr.bf16.mxu0 0
    %925 = vmatmul.mubr.bf16.gmra.mrb[0].mxu0 %v890
    %v926 = vpop.f32.mrb[0].mxu0
    %v927 = vadd.f32 %v881, %v926
    %v928 = vpop.f32.mrb[0].mxu0
    %v929 = vpop.f32.mrb[0].mxu0
    %v930 = vpop.f32.mrb[0].mxu0
    %931 = vdwg.mxu0
    %v932 = vmax.f32 %v927, 0.0
    %v933 = vpack.c.bf16 %v932, %v932
    %v934 = vld [vmem:[#allocation20] sm:$0xf]
    %v935 = vld [vmem:[#allocation20 + $0x4] sm:$0xf]
    %v936 = vld [vmem:[#allocation20 + $0x8] sm:$0x3]
    %v937 = vld [vmem:[#allocation22] sm:$0x1]
    %v939 = vlaneseq
    %v940 = vshrl.u32 %v939, 7
    %v941 = vsub.s32 0, %v940
    %v942 = vrot.slane %v937, %v941
    %v947 = vunpack.c.l.b16 %v934
    %v948 = vunpack.c.l.b16 %v935
    %v949 = vunpack.c.l.b16 %v936
    %v950 = vpack.c.b16 %v948, %v947
    %v951 = vpack.c.b16 %v949, %v949
    %v954 = vsel %vm825, %v933, 0
    %v957 = vsel %vm760, %v951, 0
    %959 = vmatprep.subr.bf16.mxu0 0
    %960 = vmatpush1.bf16.msra.mxu0 %v950
    %961 = vmatprep.subr.bf16.mxu0 0
    %962 = vmatpush1.bf16.msra.mxu0 %v957
    %963 = vmatprep.subr.bf16.mxu0 0
    %964 = vmatpush1.bf16.msra.mxu0 0
    %965 = vmatprep.subr.bf16.mxu0 0
    %966 = vmatpush1.bf16.msra.mxu0 0
    %967 = vmatprep.subr.bf16.mxu0 0
    %968 = vmatpush1.bf16.msra.mxu0 0
    %969 = vmatprep.subr.bf16.mxu0 0
    %970 = vmatpush1.bf16.msra.mxu0 0
    %971 = vmatprep.subr.bf16.mxu0 0
    %972 = vmatpush1.bf16.msra.mxu0 0
    %973 = vmatprep.subr.bf16.mxu0 0
    %974 = vmatpush1.bf16.msra.mxu0 0
    %975 = vmatprep.subr.bf16.mxu0 0
    %976 = vmatpush1.bf16.msra.mxu0 0
    %977 = vmatprep.subr.bf16.mxu0 0
    %978 = vmatpush1.bf16.msra.mxu0 0
    %979 = vmatprep.subr.bf16.mxu0 0
    %980 = vmatpush1.bf16.msra.mxu0 0
    %981 = vmatprep.subr.bf16.mxu0 0
    %982 = vmatpush1.bf16.msra.mxu0 0
    %983 = vmatprep.subr.bf16.mxu0 0
    %984 = vmatpush1.bf16.msra.mxu0 0
    %985 = vmatprep.subr.bf16.mxu0 0
    %986 = vmatpush1.bf16.msra.mxu0 0
    %987 = vmatprep.subr.bf16.mxu0 0
    %988 = vmatpush1.bf16.msra.mxu0 0
    %989 = vmatprep.subr.bf16.mxu0 0
    %990 = vmatpush1.bf16.msra.mxu0 0
    %991 = vmatprep.mubr.bf16.mxu0 0
    %992 = vmatmul.mubr.bf16.gmra.mrb[0].mxu0 %v954
    %v993 = vpop.f32.mrb[0].mxu0
    %v994 = vadd.f32 %v942, %v993
    %v995 = vpop.f32.mrb[0].mxu0
    %v996 = vpop.f32.mrb[0].mxu0
    %v997 = vpop.f32.mrb[0].mxu0
    %998 = vdwg.mxu0
    %v999 = vmax.f32 %v994, 0.0
    %v1000 = vpack.c.bf16 %v999, %v999
    %v1001 = vld [vmem:[#allocation23] sm:$0xf]
    %v1002 = vld [vmem:[#allocation23 + $0x4] sm:$0xf]
    %v1003 = vld [vmem:[#allocation23 + $0x8] sm:$0xf]
    %v1004 = vld [vmem:[#allocation23 + $0xc] sm:$0xf]
    %v1005 = vld [vmem:[#allocation23 + $0x10] sm:$0xf]
    %v1006 = vld [vmem:[#allocation23 + $0x14] sm:$0xf]
    %v1007 = vld [vmem:[#allocation23 + $0x18] sm:$0x1]
    %v1008 = vld [vmem:[#allocation25] sm:$0x1]
    %v1010 = vlaneseq
    %v1011 = vshrl.u32 %v1010, 7
    %v1012 = vsub.s32 0, %v1011
    %v1013 = vrot.slane %v1008, %v1012
    %v1022 = vunpack.c.l.b16 %v1001
    %v1023 = vunpack.c.l.b16 %v1002
    %v1024 = vunpack.c.l.b16 %v1003
    %v1025 = vunpack.c.l.b16 %v1004
    %v1026 = vunpack.c.l.b16 %v1005
    %v1027 = vunpack.c.l.b16 %v1006
    %v1028 = vunpack.c.l.b16 %v1007
    %v1029 = vpack.c.b16 %v1023, %v1022
    %v1030 = vpack.c.b16 %v1025, %v1024
    %v1031 = vpack.c.b16 %v1027, %v1026
    %v1032 = vpack.c.b16 %v1028, %v1028
    %vm1036 = vcmask 408576
    %v1038 = vsel %vm1036, %v1000, 0
    %vm1040 = vcmask 1040384
    %v1042 = vsel %vm1040, %v1032, 0
    %1044 = vmatprep.subr.bf16.mxu0 0
    %1045 = vmatpush1.bf16.msra.mxu0 %v1029
    %1046 = vmatprep.subr.bf16.mxu0 0
    %1047 = vmatpush1.bf16.msra.mxu0 %v1030
    %1048 = vmatprep.subr.bf16.mxu0 0
    %1049 = vmatpush1.bf16.msra.mxu0 %v1031
    %1050 = vmatprep.subr.bf16.mxu0 0
    %1051 = vmatpush1.bf16.msra.mxu0 %v1042
    %1052 = vmatprep.subr.bf16.mxu0 0
    %1053 = vmatpush1.bf16.msra.mxu0 0
    %1054 = vmatprep.subr.bf16.mxu0 0
    %1055 = vmatpush1.bf16.msra.mxu0 0
    %1056 = vmatprep.subr.bf16.mxu0 0
    %1057 = vmatpush1.bf16.msra.mxu0 0
    %1058 = vmatprep.subr.bf16.mxu0 0
    %1059 = vmatpush1.bf16.msra.mxu0 0
    %1060 = vmatprep.subr.bf16.mxu0 0
    %1061 = vmatpush1.bf16.msra.mxu0 0
    %1062 = vmatprep.subr.bf16.mxu0 0
    %1063 = vmatpush1.bf16.msra.mxu0 0
    %1064 = vmatprep.subr.bf16.mxu0 0
    %1065 = vmatpush1.bf16.msra.mxu0 0
    %1066 = vmatprep.subr.bf16.mxu0 0
    %1067 = vmatpush1.bf16.msra.mxu0 0
    %1068 = vmatprep.subr.bf16.mxu0 0
    %1069 = vmatpush1.bf16.msra.mxu0 0
    %1070 = vmatprep.subr.bf16.mxu0 0
    %1071 = vmatpush1.bf16.msra.mxu0 0
    %1072 = vmatprep.subr.bf16.mxu0 0
    %1073 = vmatpush1.bf16.msra.mxu0 0
    %1074 = vmatprep.subr.bf16.mxu0 0
    %1075 = vmatpush1.bf16.msra.mxu0 0
    %1076 = vmatprep.mubr.bf16.mxu0 0
    %1077 = vmatmul.mubr.bf16.gmra.mrb[0].mxu0 %v1038
    %v1078 = vpop.f32.mrb[0].mxu0
    %v1079 = vadd.f32 %v1013, %v1078
    %v1080 = vpop.f32.mrb[0].mxu0
    %v1081 = vpop.f32.mrb[0].mxu0
    %v1082 = vpop.f32.mrb[0].mxu0
    %1083 = vdwg.mxu0
    %1084 = vmax.xlane.f32.xlu0 %v1079
    %v1085 = vpop.xlane.xlu0 %1084
    %v1086 = vsub.f32 %v1079, %v1085
    %v1087 = vmul.f32 %v1086, 1.442695
    %v1088 = vpow.pop %v1087
    %1089 = vadd.xlane.f32.xlu0 %v1088
    %v1090 = vpop.xlane.xlu0 %1089
    %v1091 = vrcp.pop %v1090
    %v1092 = vmul.f32 %v1088, %v1091
    %1093 = vst [vmem:[#allocation26] sm:$0xff] %v1092
    // Predicated region
    $region122: #{tpu_custom_call.1} parent=1 // pred_check
      _
    $region123: #{tpu_custom_call.1} parent=1 // pred_check_branch
      %1095 = sbr.rel (0) target = $region125
    $region124: #{tpu_custom_call.1} parent=1 // pred_region
      %s1097 = ssub.s32 128, 128
      %1098 = vsyncadd [#allocation4], %s1097
      %s1100 = sshll.u32 [#allocation26], 4
      %s1101 = int_to_ptr.vmem [resolvable:$true] %s1100
      %1103 = dma.vmem_to_hbm [thread:$0]  %s1101, 128, %s15, [#allocation4]
    $region125: #{tpu_custom_call.1} parent=1 // pred_fallthru
      _
    // Predicated region
    $region126: #{tpu_custom_call.1} parent=1 // pred_check
      _
    $region127: #{tpu_custom_call.1} parent=1 // pred_check_branch
      %1105 = sbr.rel (0) target = $region129
    $region128: #{tpu_custom_call.1} parent=1 // pred_region
      %1106 = dma.done [#allocation4], 128
    $region129: #{tpu_custom_call.1} parent=1 // pred_fallthru
      _
    %1107 = vsyncpa [#allocation3], 1
    %1108 = vsyncpa [#allocation6], 1
    %1109 = vsyncpa [#allocation9], 1
    %1110 = vsyncpa [#allocation12], 1
    %1111 = vsyncpa [#allocation15], 1
    %1112 = vsyncpa [#allocation18], 1
    %1113 = vsyncpa [#allocation21], 1
    %1114 = vsyncpa [#allocation24], 1
    %1115 = vsyncpa [#allocation4], 1

</llo_original>
